<compile_context>
chip_gen: v7x
topology: tpu7x:2x2x1
jax: 0.10.0
libtpu: 0.0.40
codegen_flags: <defaults>
</compile_context>

<pallas_src>
import jax
import jax.numpy as jnp
from jax.experimental import pallas as pl
from jax.experimental.pallas import tpu as pltpu


def _round_up(x: int, m: int) -> int:
    return (x + m - 1) // m * m


def _pick_tn(v_pad: int) -> int:
    # v_pad is always a multiple of 128; pick the biggest aligned tile <= 512.
    for tn in (512, 256, 128):
        if v_pad % tn == 0:
            return tn
    return 128


def bigram_kernel(idx_ref, wte_ref, wt_ref, out_ref, emb_ref):
    # idx_ref : SMEM (BT_pad,)      int32 token ids (scalar-prefetched, pre-clamped)
    # wte_ref : VMEM (V+1, E)  f32  embedding table (constant block index -> stays resident)
    # wt_ref  : VMEM (E, TN)   bf16 current head-weight tile (pipelined over vocab)
    # out_ref : VMEM (BT_pad, TN)   current logits tile (f32)
    # emb_ref : VMEM (BT_pad, E) f32 scratch for gathered embeddings
    bt_pad = emb_ref.shape[0]

    # Gather embedding rows. Re-done each grid step (tiny: BT rows) so the
    # kernel stays correct when the vocab axis is split across TensorCores.
    # unroll=True -> straight-line sublane copies, no serial loop overhead.
    def gather_row(i, carry):
        tok = idx_ref[i]
        emb_ref[pl.ds(i, 1), :] = wte_ref[pl.ds(tok, 1), :]
        return carry

    jax.lax.fori_loop(0, bt_pad, gather_row, 0, unroll=True)

    # lm_head tile: logits[:, j*TN:(j+1)*TN] = emb @ W.T[:, tile]
    # bf16 operands -> native MXU rate; f32 accumulation keeps accuracy.
    a = emb_ref[...].astype(wt_ref.dtype)
    out_ref[...] = jnp.dot(
        a, wt_ref[...], preferred_element_type=jnp.float32
    ).astype(out_ref.dtype)


def prepare_bigram_params(wte, lm_head_w, *, compute_dtype=jnp.bfloat16):
    """One-time parameter prep (do this at init, NOT per forward call).

    wte        : (V+1, E) f32  -> kept f32 (exact row gather, tiny table)
    lm_head_w  : (V, E)   f32  -> transposed once to (E, V_pad), vocab padded
                                  to a multiple of 128, cast to bf16.
    """
    V, E = lm_head_w.shape
    v_pad = _round_up(V, 128)
    wt = jnp.zeros((E, v_pad), compute_dtype)
    wt = wt.at[:, :V].set(lm_head_w.T.astype(compute_dtype))
    return wte.astype(jnp.float32), wt


def bigram_forward(idx, wte, wt_padded, vocab_size):
    """idx: (B, T) int32, wte: (V+1, E) f32, wt_padded: (E, V_pad) bf16 -> (B, T, V) f32."""
    B, T = idx.shape
    vp1, E = wte.shape
    _, v_pad = wt_padded.shape
    bt = B * T
    bt_pad = max(_round_up(bt, 8), 8)
    tn = _pick_tn(v_pad)
    grid = (v_pad // tn,)

    # Flatten, clamp (so padding rows / stray ids never index OOB in VMEM),
    # and pad the token ids to a sublane multiple.
    ids_flat = jnp.clip(idx.reshape(bt).astype(jnp.int32), 0, vp1 - 1)
    ids = jnp.zeros((bt_pad,), jnp.int32).at[:bt].set(ids_flat)

    # Explicit VMEM budget: table + double-buffered weight/out tiles + emb scratch.
    wt_item = jnp.dtype(wt_padded.dtype).itemsize
    needed = (
        vp1 * E * 4                    # embedding table (single buffer)
        + 2 * E * tn * wt_item         # double-buffered weight tiles
        + 2 * bt_pad * tn * 4          # double-buffered output tiles
        + bt_pad * E * 4               # emb scratch
    )
    vmem_limit = int(min(max(2 * needed, 16 * 1024 * 1024), 64 * 1024 * 1024))

    out = pl.pallas_call(
        bigram_kernel,
        out_shape=jax.ShapeDtypeStruct((bt_pad, v_pad), jnp.float32),
        grid_spec=pltpu.PrefetchScalarGridSpec(
            num_scalar_prefetch=1,                               # ids -> SMEM
            grid=grid,
            in_specs=[
                pl.BlockSpec((vp1, E), lambda j, _ids: (0, 0)),  # full table, constant block
                pl.BlockSpec((E, tn), lambda j, _ids: (0, j)),   # streamed weight tiles
            ],
            out_specs=pl.BlockSpec((bt_pad, tn), lambda j, _ids: (0, j)),
            scratch_shapes=[pltpu.VMEM((bt_pad, E), jnp.float32)],
        ),
        compiler_params=pltpu.CompilerParams(
            dimension_semantics=("parallel",),                   # vocab tiles are independent
            vmem_limit_bytes=vmem_limit,
        ),
        cost_estimate=pl.CostEstimate(
            flops=2 * bt_pad * E * v_pad,
            transcendentals=0,
            bytes_accessed=(E * v_pad * wt_item          # head weight streamed once
                            + bt_pad * v_pad * 4         # logits written once
                            + vp1 * E * 4                # embedding table
                            + bt_pad * 4),               # ids
        ),
    )(ids, wte, wt_padded)

    return out[:bt, :vocab_size].reshape(B, T, vocab_size)


if __name__ == "__main__":
    # Small config consistent with the module: vocab_size, n_embd, block_size.
    vocab_size = 32
    n_embd = 32
    block_size = 8
    B, T = 2, block_size

    key = jax.random.PRNGKey(0)
    k_idx, k_wte, k_head = jax.random.split(key, 3)

    # Shapes from Bigram.__init__:
    #   wte: Embedding(vocab_size + 1, n_embd); lm_head: Linear(n_embd, vocab_size, bias=False)*0.1
    wte = jax.random.normal(k_wte, (vocab_size + 1, n_embd), dtype=jnp.float32)
    lm_head_w = 0.1 * jax.random.normal(k_head, (vocab_size, n_embd), dtype=jnp.float32)
    idx = jax.random.randint(k_idx, (B, T), 0, vocab_size + 1, dtype=jnp.int32)

    # One-time parameter prep (transpose / pad / bf16 cast happens here, not per call).
    wte_p, wt_p = prepare_bigram_params(wte, lm_head_w)

    fwd = jax.jit(bigram_forward, static_argnums=(3,))
    logits = fwd(idx, wte_p, wt_p, vocab_size)
    logits = jax.block_until_ready(logits)

    # Pure-JAX f32 reference: tok_emb = wte[idx]; logits = tok_emb @ W.T
    ref = jnp.take(wte, idx, axis=0) @ lm_head_w.T
    assert logits.shape == (B, T, vocab_size)
    assert jnp.allclose(logits, ref, rtol=5e-2, atol=5e-2), float(jnp.max(jnp.abs(logits - ref)))

    print("KERNEL_OK")
</pallas_src>

<mosaic_0001>
module attributes {stable_mosaic.version = 11 : i64} {
  func.func @bigram_kernel(%arg0: i32, %arg1: memref<16xi32, #tpu.memory_space<smem>>, %arg2: memref<33x32xf32, #tpu.memory_space<vmem>>, %arg3: memref<32x128xbf16, #tpu.memory_space<vmem>>, %arg4: memref<16x128xf32, #tpu.memory_space<vmem>>, %arg5: memref<16x32xf32, #tpu.memory_space<vmem>>) attributes {dimension_semantics = [#tpu.dimension_semantics<parallel>], iteration_bounds = array<i64: 1>, scalar_prefetch = 1 : i64, scratch_operands = 1 : i64, tpu.core_type = #tpu.core_type<tc>, window_params = [{pipeline_mode = #tpu.pipeline_mode<synchronous>, transform_indices = @transform_0, window_bounds = array<i64: 33, 32>}, {transform_indices = @transform_1, window_bounds = array<i64: 32, 128>}, {transform_indices = @transform_2, window_bounds = array<i64: 16, 128>}]} {
    %c0_i32 = arith.constant 0 : i32
    %0 = arith.index_cast %c0_i32 : i32 to index
    %1 = memref.load %arg1[%0] : memref<16xi32, #tpu.memory_space<smem>>
    %2 = arith.index_cast %1 : i32 to index
    %c0 = arith.constant 0 : index
    %3 = vector.load %arg2[%2, %c0] : memref<33x32xf32, #tpu.memory_space<vmem>>, vector<1x32xf32>
    %4 = arith.index_cast %c0_i32 : i32 to index
    %c0_0 = arith.constant 0 : index
    %5 = vector.load %arg5[%4, %c0_0] : memref<16x32xf32, #tpu.memory_space<vmem>>, vector<1x32xf32>
    tpu.vector_store %arg5[%4, %c0_0], %3 {strides = array<i32>} : memref<16x32xf32, #tpu.memory_space<vmem>>, vector<1x32xf32>,
    %c1_i32 = arith.constant 1 : i32
    %6 = arith.index_cast %c1_i32 : i32 to index
    %7 = memref.load %arg1[%6] : memref<16xi32, #tpu.memory_space<smem>>
    %8 = arith.index_cast %7 : i32 to index
    %c0_1 = arith.constant 0 : index
    %9 = vector.load %arg2[%8, %c0_1] : memref<33x32xf32, #tpu.memory_space<vmem>>, vector<1x32xf32>
    %10 = arith.index_cast %c1_i32 : i32 to index
    %c0_2 = arith.constant 0 : index
    %11 = vector.load %arg5[%10, %c0_2] : memref<16x32xf32, #tpu.memory_space<vmem>>, vector<1x32xf32>
    tpu.vector_store %arg5[%10, %c0_2], %9 {strides = array<i32>} : memref<16x32xf32, #tpu.memory_space<vmem>>, vector<1x32xf32>,
    %c2_i32 = arith.constant 2 : i32
    %12 = arith.index_cast %c2_i32 : i32 to index
    %13 = memref.load %arg1[%12] : memref<16xi32, #tpu.memory_space<smem>>
    %14 = arith.index_cast %13 : i32 to index
    %c0_3 = arith.constant 0 : index
    %15 = vector.load %arg2[%14, %c0_3] : memref<33x32xf32, #tpu.memory_space<vmem>>, vector<1x32xf32>
    %16 = arith.index_cast %c2_i32 : i32 to index
    %c0_4 = arith.constant 0 : index
    %17 = vector.load %arg5[%16, %c0_4] : memref<16x32xf32, #tpu.memory_space<vmem>>, vector<1x32xf32>
    tpu.vector_store %arg5[%16, %c0_4], %15 {strides = array<i32>} : memref<16x32xf32, #tpu.memory_space<vmem>>, vector<1x32xf32>,
    %c3_i32 = arith.constant 3 : i32
    %18 = arith.index_cast %c3_i32 : i32 to index
    %19 = memref.load %arg1[%18] : memref<16xi32, #tpu.memory_space<smem>>
    %20 = arith.index_cast %19 : i32 to index
    %c0_5 = arith.constant 0 : index
    %21 = vector.load %arg2[%20, %c0_5] : memref<33x32xf32, #tpu.memory_space<vmem>>, vector<1x32xf32>
    %22 = arith.index_cast %c3_i32 : i32 to index
    %c0_6 = arith.constant 0 : index
    %23 = vector.load %arg5[%22, %c0_6] : memref<16x32xf32, #tpu.memory_space<vmem>>, vector<1x32xf32>
    tpu.vector_store %arg5[%22, %c0_6], %21 {strides = array<i32>} : memref<16x32xf32, #tpu.memory_space<vmem>>, vector<1x32xf32>,
    %c4_i32 = arith.constant 4 : i32
    %24 = arith.index_cast %c4_i32 : i32 to index
    %25 = memref.load %arg1[%24] : memref<16xi32, #tpu.memory_space<smem>>
    %26 = arith.index_cast %25 : i32 to index
    %c0_7 = arith.constant 0 : index
    %27 = vector.load %arg2[%26, %c0_7] : memref<33x32xf32, #tpu.memory_space<vmem>>, vector<1x32xf32>
    %28 = arith.index_cast %c4_i32 : i32 to index
    %c0_8 = arith.constant 0 : index
    %29 = vector.load %arg5[%28, %c0_8] : memref<16x32xf32, #tpu.memory_space<vmem>>, vector<1x32xf32>
    tpu.vector_store %arg5[%28, %c0_8], %27 {strides = array<i32>} : memref<16x32xf32, #tpu.memory_space<vmem>>, vector<1x32xf32>,
    %c5_i32 = arith.constant 5 : i32
    %30 = arith.index_cast %c5_i32 : i32 to index
    %31 = memref.load %arg1[%30] : memref<16xi32, #tpu.memory_space<smem>>
    %32 = arith.index_cast %31 : i32 to index
    %c0_9 = arith.constant 0 : index
    %33 = vector.load %arg2[%32, %c0_9] : memref<33x32xf32, #tpu.memory_space<vmem>>, vector<1x32xf32>
    %34 = arith.index_cast %c5_i32 : i32 to index
    %c0_10 = arith.constant 0 : index
    %35 = vector.load %arg5[%34, %c0_10] : memref<16x32xf32, #tpu.memory_space<vmem>>, vector<1x32xf32>
    tpu.vector_store %arg5[%34, %c0_10], %33 {strides = array<i32>} : memref<16x32xf32, #tpu.memory_space<vmem>>, vector<1x32xf32>,
    %c6_i32 = arith.constant 6 : i32
    %36 = arith.index_cast %c6_i32 : i32 to index
    %37 = memref.load %arg1[%36] : memref<16xi32, #tpu.memory_space<smem>>
    %38 = arith.index_cast %37 : i32 to index
    %c0_11 = arith.constant 0 : index
    %39 = vector.load %arg2[%38, %c0_11] : memref<33x32xf32, #tpu.memory_space<vmem>>, vector<1x32xf32>
    %40 = arith.index_cast %c6_i32 : i32 to index
    %c0_12 = arith.constant 0 : index
    %41 = vector.load %arg5[%40, %c0_12] : memref<16x32xf32, #tpu.memory_space<vmem>>, vector<1x32xf32>
    tpu.vector_store %arg5[%40, %c0_12], %39 {strides = array<i32>} : memref<16x32xf32, #tpu.memory_space<vmem>>, vector<1x32xf32>,
    %c7_i32 = arith.constant 7 : i32
    %42 = arith.index_cast %c7_i32 : i32 to index
    %43 = memref.load %arg1[%42] : memref<16xi32, #tpu.memory_space<smem>>
    %44 = arith.index_cast %43 : i32 to index
    %c0_13 = arith.constant 0 : index
    %45 = vector.load %arg2[%44, %c0_13] : memref<33x32xf32, #tpu.memory_space<vmem>>, vector<1x32xf32>
    %46 = arith.index_cast %c7_i32 : i32 to index
    %c0_14 = arith.constant 0 : index
    %47 = vector.load %arg5[%46, %c0_14] : memref<16x32xf32, #tpu.memory_space<vmem>>, vector<1x32xf32>
    tpu.vector_store %arg5[%46, %c0_14], %45 {strides = array<i32>} : memref<16x32xf32, #tpu.memory_space<vmem>>, vector<1x32xf32>,
    %c8_i32 = arith.constant 8 : i32
    %48 = arith.index_cast %c8_i32 : i32 to index
    %49 = memref.load %arg1[%48] : memref<16xi32, #tpu.memory_space<smem>>
    %50 = arith.index_cast %49 : i32 to index
    %c0_15 = arith.constant 0 : index
    %51 = vector.load %arg2[%50, %c0_15] : memref<33x32xf32, #tpu.memory_space<vmem>>, vector<1x32xf32>
    %52 = arith.index_cast %c8_i32 : i32 to index
    %c0_16 = arith.constant 0 : index
    %53 = vector.load %arg5[%52, %c0_16] : memref<16x32xf32, #tpu.memory_space<vmem>>, vector<1x32xf32>
    tpu.vector_store %arg5[%52, %c0_16], %51 {strides = array<i32>} : memref<16x32xf32, #tpu.memory_space<vmem>>, vector<1x32xf32>,
    %c9_i32 = arith.constant 9 : i32
    %54 = arith.index_cast %c9_i32 : i32 to index
    %55 = memref.load %arg1[%54] : memref<16xi32, #tpu.memory_space<smem>>
    %56 = arith.index_cast %55 : i32 to index
    %c0_17 = arith.constant 0 : index
    %57 = vector.load %arg2[%56, %c0_17] : memref<33x32xf32, #tpu.memory_space<vmem>>, vector<1x32xf32>
    %58 = arith.index_cast %c9_i32 : i32 to index
    %c0_18 = arith.constant 0 : index
    %59 = vector.load %arg5[%58, %c0_18] : memref<16x32xf32, #tpu.memory_space<vmem>>, vector<1x32xf32>
    tpu.vector_store %arg5[%58, %c0_18], %57 {strides = array<i32>} : memref<16x32xf32, #tpu.memory_space<vmem>>, vector<1x32xf32>,
    %c10_i32 = arith.constant 10 : i32
    %60 = arith.index_cast %c10_i32 : i32 to index
    %61 = memref.load %arg1[%60] : memref<16xi32, #tpu.memory_space<smem>>
    %62 = arith.index_cast %61 : i32 to index
    %c0_19 = arith.constant 0 : index
    %63 = vector.load %arg2[%62, %c0_19] : memref<33x32xf32, #tpu.memory_space<vmem>>, vector<1x32xf32>
    %64 = arith.index_cast %c10_i32 : i32 to index
    %c0_20 = arith.constant 0 : index
    %65 = vector.load %arg5[%64, %c0_20] : memref<16x32xf32, #tpu.memory_space<vmem>>, vector<1x32xf32>
    tpu.vector_store %arg5[%64, %c0_20], %63 {strides = array<i32>} : memref<16x32xf32, #tpu.memory_space<vmem>>, vector<1x32xf32>,
    %c11_i32 = arith.constant 11 : i32
    %66 = arith.index_cast %c11_i32 : i32 to index
    %67 = memref.load %arg1[%66] : memref<16xi32, #tpu.memory_space<smem>>
    %68 = arith.index_cast %67 : i32 to index
    %c0_21 = arith.constant 0 : index
    %69 = vector.load %arg2[%68, %c0_21] : memref<33x32xf32, #tpu.memory_space<vmem>>, vector<1x32xf32>
    %70 = arith.index_cast %c11_i32 : i32 to index
    %c0_22 = arith.constant 0 : index
    %71 = vector.load %arg5[%70, %c0_22] : memref<16x32xf32, #tpu.memory_space<vmem>>, vector<1x32xf32>
    tpu.vector_store %arg5[%70, %c0_22], %69 {strides = array<i32>} : memref<16x32xf32, #tpu.memory_space<vmem>>, vector<1x32xf32>,
    %c12_i32 = arith.constant 12 : i32
    %72 = arith.index_cast %c12_i32 : i32 to index
    %73 = memref.load %arg1[%72] : memref<16xi32, #tpu.memory_space<smem>>
    %74 = arith.index_cast %73 : i32 to index
    %c0_23 = arith.constant 0 : index
    %75 = vector.load %arg2[%74, %c0_23] : memref<33x32xf32, #tpu.memory_space<vmem>>, vector<1x32xf32>
    %76 = arith.index_cast %c12_i32 : i32 to index
    %c0_24 = arith.constant 0 : index
    %77 = vector.load %arg5[%76, %c0_24] : memref<16x32xf32, #tpu.memory_space<vmem>>, vector<1x32xf32>
    tpu.vector_store %arg5[%76, %c0_24], %75 {strides = array<i32>} : memref<16x32xf32, #tpu.memory_space<vmem>>, vector<1x32xf32>,
    %c13_i32 = arith.constant 13 : i32
    %78 = arith.index_cast %c13_i32 : i32 to index
    %79 = memref.load %arg1[%78] : memref<16xi32, #tpu.memory_space<smem>>
    %80 = arith.index_cast %79 : i32 to index
    %c0_25 = arith.constant 0 : index
    %81 = vector.load %arg2[%80, %c0_25] : memref<33x32xf32, #tpu.memory_space<vmem>>, vector<1x32xf32>
    %82 = arith.index_cast %c13_i32 : i32 to index
    %c0_26 = arith.constant 0 : index
    %83 = vector.load %arg5[%82, %c0_26] : memref<16x32xf32, #tpu.memory_space<vmem>>, vector<1x32xf32>
    tpu.vector_store %arg5[%82, %c0_26], %81 {strides = array<i32>} : memref<16x32xf32, #tpu.memory_space<vmem>>, vector<1x32xf32>,
    %c14_i32 = arith.constant 14 : i32
    %84 = arith.index_cast %c14_i32 : i32 to index
    %85 = memref.load %arg1[%84] : memref<16xi32, #tpu.memory_space<smem>>
    %86 = arith.index_cast %85 : i32 to index
    %c0_27 = arith.constant 0 : index
    %87 = vector.load %arg2[%86, %c0_27] : memref<33x32xf32, #tpu.memory_space<vmem>>, vector<1x32xf32>
    %88 = arith.index_cast %c14_i32 : i32 to index
    %c0_28 = arith.constant 0 : index
    %89 = vector.load %arg5[%88, %c0_28] : memref<16x32xf32, #tpu.memory_space<vmem>>, vector<1x32xf32>
    tpu.vector_store %arg5[%88, %c0_28], %87 {strides = array<i32>} : memref<16x32xf32, #tpu.memory_space<vmem>>, vector<1x32xf32>,
    %c15_i32 = arith.constant 15 : i32
    %90 = arith.index_cast %c15_i32 : i32 to index
    %91 = memref.load %arg1[%90] : memref<16xi32, #tpu.memory_space<smem>>
    %92 = arith.index_cast %91 : i32 to index
    %c0_29 = arith.constant 0 : index
    %93 = vector.load %arg2[%92, %c0_29] : memref<33x32xf32, #tpu.memory_space<vmem>>, vector<1x32xf32>
    %94 = arith.index_cast %c15_i32 : i32 to index
    %c0_30 = arith.constant 0 : index
    %95 = vector.load %arg5[%94, %c0_30] : memref<16x32xf32, #tpu.memory_space<vmem>>, vector<1x32xf32>
    tpu.vector_store %arg5[%94, %c0_30], %93 {strides = array<i32>} : memref<16x32xf32, #tpu.memory_space<vmem>>, vector<1x32xf32>,
    %c16_i32 = arith.constant 16 : i32
    %c0_31 = arith.constant 0 : index
    %c0_32 = arith.constant 0 : index
    %96 = vector.load %arg5[%c0_31, %c0_32] : memref<16x32xf32, #tpu.memory_space<vmem>>, vector<16x32xf32>
    %97 = arith.truncf %96 : vector<16x32xf32> to vector<16x32xbf16>
    %c0_33 = arith.constant 0 : index
    %c0_34 = arith.constant 0 : index
    %98 = vector.load %arg3[%c0_33, %c0_34] : memref<32x128xbf16, #tpu.memory_space<vmem>>, vector<32x128xbf16>
    %cst = arith.constant dense<0.000000e+00> : vector<16x128xf32>
    %99 = tpu.matmul %97, %98, %cst {dimension_numbers = #tpu.dot_dimension_numbers<[1], [0], [0], [1], [0, 0, 1, 1], [], []>} : vector<16x32xbf16>, vector<32x128xbf16>, vector<16x128xf32> -> vector<16x128xf32>
    %c0_35 = arith.constant 0 : index
    %c0_36 = arith.constant 0 : index
    %100 = vector.load %arg4[%c0_35, %c0_36] : memref<16x128xf32, #tpu.memory_space<vmem>>, vector<16x128xf32>
    tpu.vector_store %arg4[%c0_35, %c0_36], %99 {strides = array<i32>} : memref<16x128xf32, #tpu.memory_space<vmem>>, vector<16x128xf32>,
    return
  }
  func.func @transform_0(%arg0: i32, %arg1: memref<16xi32, #tpu.memory_space<smem>>) -> (i32, i32) {
    %c0_i32 = arith.constant 0 : i32
    %c0_i32_0 = arith.constant 0 : i32
    %c0_i32_1 = arith.constant 0 : i32
    return %c0_i32, %c0_i32_0 : i32, i32
  }
  func.func @transform_1(%arg0: i32, %arg1: memref<16xi32, #tpu.memory_space<smem>>) -> (i32, i32) {
    %c0_i32 = arith.constant 0 : i32
    %c0_i32_0 = arith.constant 0 : i32
    return %c0_i32, %arg0 : i32, i32
  }
  func.func @transform_2(%arg0: i32, %arg1: memref<16xi32, #tpu.memory_space<smem>>) -> (i32, i32) {
    %c0_i32 = arith.constant 0 : i32
    %c0_i32_0 = arith.constant 0 : i32
    return %c0_i32, %arg0 : i32, i32
  }
}

</mosaic_0001>

<llo_original>
// kernel: bigram_forward.1
$region0: #{bigram_forward.1}
  #allocation0 [shape = 'u32[]', space=smem, size = 0x4, offset = 0x4, fixed_abs, tag = 'smem constant byte address 0x4 - core index']
  #allocation1 [shape = 'u32[144,128]{1,0:T(1,128)}', space=vmem, size = 0x12000, scoped, tag = 'internal scratch']
  #allocation2 [shape = 'f32[16,32]{1,0:T(8,128)}', space=vmem, size = 0x2000, scoped, tag = 'scratch operand']
  #allocation3 [shape = 's32[1]{0}', space=sflag, size = 0x4, scoped, tag = 'scoped memory for bigram_forward.1']
  #allocation4 [shape = 'u8[512]{0}', space=smem, size = 0x200, scoped, tag = 'prefetched SMEM operand 0']
  %s0 = inlined_call_operand.vmem [shape: s32[16], index: 0, kind: input, shape index: {}]
  %s1 = inlined_call_operand.vmem [shape: f32[33,32], index: 1, kind: input, shape index: {}]
  %s2 = inlined_call_operand.vmem [shape: bf16[32,128], index: 2, kind: input, shape index: {}]
  %s3 = inlined_call_operand.vmem [shape: f32[16,128], index: 3, kind: output, shape index: {}]
  %s4 = sld [smem:[#allocation0]]
  $region18: #{bigram_forward.1} parent=0
    _
  %s6 = ssub.s32 1, %s4
  %s7 = scalar_select 0, %s6, %s4
  %s8 = sshll.u32 %s0, 4
  %s9 = int_to_ptr.vmem [resolvable:$true] %s8
  %11 = dma.vmem_to_smem %s9, 16, [#allocation4], [#allocation3]
  %12 = dma.done [#allocation3], 16
  %13 = sfence
  // Predicated region
  $region2: #{bigram_forward.1} parent=0 // pred_check
    _
  $region3: #{bigram_forward.1} parent=0 // pred_check_branch
    %15 = sbr.rel (0) target = $region5
  $region4: #{bigram_forward.1} parent=0 // pred_region
    _
  $region5: #{bigram_forward.1} parent=0 // pred_fallthru
    _
  // Predicated region
  $region6: #{bigram_forward.1} parent=0 // pred_check
    _
  $region7: #{bigram_forward.1} parent=0 // pred_check_branch
    %17 = sbr.rel (0) target = $region9
  $region8: #{bigram_forward.1} parent=0 // pred_region
    _
  $region9: #{bigram_forward.1} parent=0 // pred_fallthru
    _
  %s19 = sld [smem:[#allocation4]]
  %s20 = scalar_lea.vmem %s1, %s19
  %v21 = vld [vmem:[%s20] sm:$0x1]
  %vm22 = vcmask 253952
  %23 = vst.msk [vmem:[#allocation2] sm:$0x1] %vm22, %v21
  %s24 = sld [smem:[#allocation4 + $0x1]]
  %s25 = scalar_lea.vmem %s1, %s24
  %v26 = vld [vmem:[%s25] sm:$0x1]
  %27 = vst.msk [vmem:[#allocation2 + $0x1] sm:$0x1] %vm22, %v26
  %s28 = sld [smem:[#allocation4 + $0x2]]
  %s29 = scalar_lea.vmem %s1, %s28
  %v30 = vld [vmem:[%s29] sm:$0x1]
  %31 = vst.msk [vmem:[#allocation2 + $0x2] sm:$0x1] %vm22, %v30
  %s32 = sld [smem:[#allocation4 + $0x3]]
  %s33 = scalar_lea.vmem %s1, %s32
  %v34 = vld [vmem:[%s33] sm:$0x1]
  %35 = vst.msk [vmem:[#allocation2 + $0x3] sm:$0x1] %vm22, %v34
  %s36 = sld [smem:[#allocation4 + $0x4]]
  %s37 = scalar_lea.vmem %s1, %s36
  %v38 = vld [vmem:[%s37] sm:$0x1]
  %39 = vst.msk [vmem:[#allocation2 + $0x4] sm:$0x1] %vm22, %v38
  %s40 = sld [smem:[#allocation4 + $0x5]]
  %s41 = scalar_lea.vmem %s1, %s40
  %v42 = vld [vmem:[%s41] sm:$0x1]
  %43 = vst.msk [vmem:[#allocation2 + $0x5] sm:$0x1] %vm22, %v42
  %s44 = sld [smem:[#allocation4 + $0x6]]
  %s45 = scalar_lea.vmem %s1, %s44
  %v46 = vld [vmem:[%s45] sm:$0x1]
  %47 = vst.msk [vmem:[#allocation2 + $0x6] sm:$0x1] %vm22, %v46
  %s48 = sld [smem:[#allocation4 + $0x7]]
  %s49 = scalar_lea.vmem %s1, %s48
  %v50 = vld [vmem:[%s49] sm:$0x1]
  %51 = vst.msk [vmem:[#allocation2 + $0x7] sm:$0x1] %vm22, %v50
  %s52 = sld [smem:[#allocation4 + $0x8]]
  %s53 = scalar_lea.vmem %s1, %s52
  %v54 = vld [vmem:[%s53] sm:$0x1]
  %55 = vst.msk [vmem:[#allocation2 + $0x8] sm:$0x1] %vm22, %v54
  %s56 = sld [smem:[#allocation4 + $0x9]]
  %s57 = scalar_lea.vmem %s1, %s56
  %v58 = vld [vmem:[%s57] sm:$0x1]
  %59 = vst.msk [vmem:[#allocation2 + $0x9] sm:$0x1] %vm22, %v58
  %s60 = sld [smem:[#allocation4 + $0xa]]
  %s61 = scalar_lea.vmem %s1, %s60
  %v62 = vld [vmem:[%s61] sm:$0x1]
  %63 = vst.msk [vmem:[#allocation2 + $0xa] sm:$0x1] %vm22, %v62
  %s64 = sld [smem:[#allocation4 + $0xb]]
  %s65 = scalar_lea.vmem %s1, %s64
  %v66 = vld [vmem:[%s65] sm:$0x1]
  %67 = vst.msk [vmem:[#allocation2 + $0xb] sm:$0x1] %vm22, %v66
  %s68 = sld [smem:[#allocation4 + $0xc]]
  %s69 = scalar_lea.vmem %s1, %s68
  %v70 = vld [vmem:[%s69] sm:$0x1]
  %71 = vst.msk [vmem:[#allocation2 + $0xc] sm:$0x1] %vm22, %v70
  %s72 = sld [smem:[#allocation4 + $0xd]]
  %s73 = scalar_lea.vmem %s1, %s72
  %v74 = vld [vmem:[%s73] sm:$0x1]
  %75 = vst.msk [vmem:[#allocation2 + $0xd] sm:$0x1] %vm22, %v74
  %s76 = sld [smem:[#allocation4 + $0xe]]
  %s77 = scalar_lea.vmem %s1, %s76
  %v78 = vld [vmem:[%s77] sm:$0x1]
  %79 = vst.msk [vmem:[#allocation2 + $0xe] sm:$0x1] %vm22, %v78
  %s80 = sld [smem:[#allocation4 + $0xf]]
  %s81 = scalar_lea.vmem %s1, %s80
  %v82 = vld [vmem:[%s81] sm:$0x1]
  %83 = vst.msk [vmem:[#allocation2 + $0xf] sm:$0x1] %vm22, %v82
  %v84 = vld [vmem:[#allocation2] sm:$0xff]
  %v85 = vld [vmem:[#allocation2 + $0x8] sm:$0xff]
  %v86 = vpack.c.bf16 %v85, %v84
  %v87 = vld [vmem:[%s2] sm:$0xf]
  %v88 = vld [vmem:[%s2 + $0x4] sm:$0xf]
  %v89 = vld [vmem:[%s2 + $0x8] sm:$0xf]
  %v90 = vld [vmem:[%s2 + $0xc] sm:$0xf]
  %v95 = vunpack.c.l.b16 %v87
  %v96 = vunpack.c.l.b16 %v88
  %v97 = vunpack.c.l.b16 %v89
  %v98 = vunpack.c.l.b16 %v90
  %v99 = vpack.c.b16 %v96, %v95
  %v100 = vpack.c.b16 %v98, %v97
  %vm103 = vcmask 261120
  %v105 = vsel %vm103, %v86, 0
  %107 = vmatprep.subr.bf16.mxu0 0
  %108 = vmatpush1.bf16.msra.mxu0 %v99
  %109 = vmatprep.subr.bf16.mxu0 0
  %110 = vmatpush1.bf16.msra.mxu0 %v100
  %111 = vmatprep.subr.bf16.mxu0 0
  %112 = vmatpush1.bf16.msra.mxu0 0
  %113 = vmatprep.subr.bf16.mxu0 0
  %114 = vmatpush1.bf16.msra.mxu0 0
  %115 = vmatprep.subr.bf16.mxu0 0
  %116 = vmatpush1.bf16.msra.mxu0 0
  %117 = vmatprep.subr.bf16.mxu0 0
  %118 = vmatpush1.bf16.msra.mxu0 0
  %119 = vmatprep.subr.bf16.mxu0 0
  %120 = vmatpush1.bf16.msra.mxu0 0
  %121 = vmatprep.subr.bf16.mxu0 0
  %122 = vmatpush1.bf16.msra.mxu0 0
  %123 = vmatprep.subr.bf16.mxu0 0
  %124 = vmatpush1.bf16.msra.mxu0 0
  %125 = vmatprep.subr.bf16.mxu0 0
  %126 = vmatpush1.bf16.msra.mxu0 0
  %127 = vmatprep.subr.bf16.mxu0 0
  %128 = vmatpush1.bf16.msra.mxu0 0
  %129 = vmatprep.subr.bf16.mxu0 0
  %130 = vmatpush1.bf16.msra.mxu0 0
  %131 = vmatprep.subr.bf16.mxu0 0
  %132 = vmatpush1.bf16.msra.mxu0 0
  %133 = vmatprep.subr.bf16.mxu0 0
  %134 = vmatpush1.bf16.msra.mxu0 0
  %135 = vmatprep.subr.bf16.mxu0 0
  %136 = vmatpush1.bf16.msra.mxu0 0
  %137 = vmatprep.subr.bf16.mxu0 0
  %138 = vmatpush1.bf16.msra.mxu0 0
  %139 = vmatprep.mubr.bf16.mxu0 0
  %140 = vmatmul.mubr.bf16.gmra.mrb[0].mxu0 %v105
  %v141 = vpop.f32.mrb[0].mxu0
  %v142 = vadd.f32 0.0, %v141
  %v143 = vpop.f32.mrb[0].mxu0
  %v144 = vpop.f32.mrb[0].mxu0
  %v145 = vadd.f32 0.0, %v144
  %v146 = vpop.f32.mrb[0].mxu0
  %147 = vdwg.mxu0
  %148 = vst [vmem:[%s3] sm:$0xff] %v142
  %149 = vst [vmem:[%s3 + $0x8] sm:$0xff] %v145
  // Predicated region
  $region10: #{bigram_forward.1} parent=0 // pred_check
    _
  $region11: #{bigram_forward.1} parent=0 // pred_check_branch
    %151 = sbr.rel (0) target = $region13
  $region12: #{bigram_forward.1} parent=0 // pred_region
    _
  $region13: #{bigram_forward.1} parent=0 // pred_fallthru
    _
  // Predicated region
  $region14: #{bigram_forward.1} parent=0 // pred_check
    _
  $region15: #{bigram_forward.1} parent=0 // pred_check_branch
    %153 = sbr.rel (0) target = $region17
  $region16: #{bigram_forward.1} parent=0 // pred_region
    _
  $region17: #{bigram_forward.1} parent=0 // pred_fallthru
    _

</llo_original>
